<compile_context>
chip_gen: v7x
topology: tpu7x:2x2x1
jax: 0.10.0
libtpu: 0.0.40
codegen_flags: <defaults>
</compile_context>

<pallas_src>
import functools
import math

import jax
import jax.numpy as jnp
import numpy as np
from jax.experimental import pallas as pl
from jax.experimental.pallas import tpu as pltpu

LN_EPS = 1e-5


def _vmem_limit_bytes(frac=0.75, fallback=48 * 1024 * 1024):
    """Per-call VMEM budget derived from the actual chip, with headroom."""
    try:
        info = pltpu.get_tpu_info()
        cap = getattr(info, "vmem_capacity_bytes", None)
        if cap is None:
            return fallback
        return int(cap * frac)
    except Exception:
        return fallback


# ---------------------------------------------------------------------------
# Kernel 1: pair-bias projection  (feat_2d_norm + feat_2d_weights linear)
#   grid = (B, R // Tq)  -> Tq query-rows of the pair representation per step.
#   Input pair_act arrives in bf16 (halves the dominant HBM read); LayerNorm
#   statistics are computed in f32.  Output is written directly in
#   [B, H, Q, K] (lane dim = K = R), bf16, with a single full-block store.
# ---------------------------------------------------------------------------
def _pair_bias_kernel(pair_ref, gamma_ref, beta_ref, w2dT_ref, out_ref):
    x = pair_ref[0].astype(jnp.float32)                   # [Tq, R, Cz]
    tq, r, cz = x.shape
    h = w2dT_ref.shape[0]

    # LayerNormFF(pair_dim) in f32
    mean = jnp.mean(x, axis=-1, keepdims=True)
    var = jnp.mean(jnp.square(x - mean), axis=-1, keepdims=True)
    xn = (x - mean) * jax.lax.rsqrt(var + LN_EPS)
    xn = xn * gamma_ref[0] + beta_ref[0]

    # [H, Cz] @ [Cz, Tq*R]  (bf16 operands, f32 accumulate) -> lane dim = R
    xn_flat = xn.reshape(tq * r, cz).astype(jnp.bfloat16)
    res = jax.lax.dot_general(
        w2dT_ref[...], xn_flat,
        dimension_numbers=(((1,), (1,)), ((), ())),
        preferred_element_type=jnp.float32)                # [H, Tq*R]

    # one relayout + one unmasked full-block store (no per-sublane stores)
    out_ref[0] = res.reshape(h, tq, r).astype(out_ref.dtype)


# ---------------------------------------------------------------------------
# Kernel 2: fused MSA row attention with pair bias
#   grid = (B, S) -> one MSA row per program (M = R is already MXU friendly).
#   Does query_norm, fused QKV+gate projection, masked+biased softmax per head,
#   gating into a VMEM scratch [R, Cm], then ONE K=Cm output-projection GEMM
#   and the bias_dropout_add residual.
# ---------------------------------------------------------------------------
def _msa_row_attn_kernel(msa_raw_ref, mask_ref, bias_ref,
                         gamma_ref, beta_ref, wqkvg_ref,
                         gbias_ref, wo_ref, obias_ref, out_ref,
                         gated_ref, *, num_head):
    r = msa_raw_ref.shape[2]
    cm = msa_raw_ref.shape[3]
    d = cm // num_head

    x_raw = msa_raw_ref[0, 0]                              # [R, Cm] f32

    # query_norm (LayerNormFF over channel dim), f32 statistics
    mean = jnp.mean(x_raw, axis=-1, keepdims=True)
    var = jnp.mean(jnp.square(x_raw - mean), axis=-1, keepdims=True)
    xn = (x_raw - mean) * jax.lax.rsqrt(var + LN_EPS)
    xn = xn * gamma_ref[0] + beta_ref[0]
    xb = xn.astype(jnp.bfloat16)

    # fused QKV + gate projection: one [R,Cm] @ [Cm,4Cm] MXU pass
    # (1/sqrt(d) scaling already folded into the q columns of the weight)
    proj = jnp.dot(xb, wqkvg_ref[...], preferred_element_type=jnp.float32)
    gate = jax.nn.sigmoid(proj[:, 3 * cm:] + gbias_ref[0])  # [R, Cm] f32
    qkv_b = proj[:, :3 * cm].astype(jnp.bfloat16)            # [R, 3Cm] bf16

    # key-mask bias 1e9*(mask-1); added via implicit [1,R] broadcast
    mask_bias = 1e9 * (mask_ref[0, 0, 0] - 1.0)              # [R] f32

    for h in range(num_head):                                # H small, static
        c0 = h * d
        qh = qkv_b[:, c0:c0 + d]                             # [R, d] bf16
        kh = qkv_b[:, cm + c0:cm + c0 + d]
        vh = qkv_b[:, 2 * cm + c0:2 * cm + c0 + d]

        # q . k^T via dot_general (NT form, no explicit transpose)
        logits = jax.lax.dot_general(
            qh, kh, (((1,), (1,)), ((), ())),
            preferred_element_type=jnp.float32)              # [R, R] f32
        logits = logits + mask_bias[None, :] + bias_ref[0, h]  # bf16 bias -> f32

        # softmax in f32; divide replaced by EUP approx reciprocal
        m = jnp.max(logits, axis=-1, keepdims=True)
        p = jnp.exp(logits - m)
        denom = jnp.sum(p, axis=-1, keepdims=True)
        w = p * pl.reciprocal(denom, approx=True)

        ov = jnp.dot(w.astype(jnp.bfloat16), vh,
                     preferred_element_type=jnp.float32)     # [R, d]
        # stash this head's gated output; live range of logits/p ends here
        gated_ref[:, c0:c0 + d] = (gate[:, c0:c0 + d] * ov).astype(jnp.bfloat16)

    # single output projection with K = Cm + residual + fused out_bias
    out = x_raw + obias_ref[0] + jnp.dot(
        gated_ref[...], wo_ref[...], preferred_element_type=jnp.float32)
    out_ref[0, 0] = out.astype(out_ref.dtype)


# ---------------------------------------------------------------------------
# Wrapper: parameter plumbing + two pallas_calls
# ---------------------------------------------------------------------------
def msa_row_attention_with_pair_bias(msa_raw, msa_mask, pair_act, params,
                                     block_q=None):
    B, S, R, Cm = msa_raw.shape
    Cz = pair_act.shape[-1]
    H = params["num_head"]
    assert Cm % H == 0, "msa_dim must be divisible by num_head"
    d = Cm // H
    scaling = 1.0 / math.sqrt(d)

    # query-row tile for the pair-bias kernel
    if block_q is None:
        block_q = R
        for cand in (32, 16, 8):
            if R % cand == 0:
                block_q = cand
                break
    assert R % block_q == 0

    vmem_limit = _vmem_limit_bytes()

    # weights prepared once: bf16 for MXU operands, scaling folded into q cols,
    # gate weight fused onto the QKV weight -> [Cm, 4*Cm]
    wqkv = params["wqkv"]
    wqkv_scaled = jnp.concatenate([wqkv[:, :Cm] * scaling, wqkv[:, Cm:]], axis=-1)
    wqkvg = jnp.concatenate([wqkv_scaled, params["wgate"]],
                            axis=-1).astype(jnp.bfloat16)   # [Cm, 4Cm]
    wo = params["wo"].astype(jnp.bfloat16)                  # [Cm, Cm]
    w2dT = params["w2d"].T.astype(jnp.bfloat16)             # [H, Cz]
    pair_bf16 = pair_act.astype(jnp.bfloat16)               # halve HBM read

    # ---- nonbatched pair bias, emitted directly as [B, H, Q, K] in bf16 ----
    bias_cost = pl.CostEstimate(
        flops=int(2 * B * R * R * Cz * H + 8 * B * R * R * Cz),
        transcendentals=int(B * R * R),
        bytes_accessed=int(B * R * R * Cz * 2 + B * H * R * R * 2))

    bias_bhqk = pl.pallas_call(
        _pair_bias_kernel,
        out_shape=jax.ShapeDtypeStruct((B, H, R, R), jnp.bfloat16),
        grid=(B, R // block_q),
        in_specs=[
            pl.BlockSpec((1, block_q, R, Cz), lambda b, q: (b, q, 0, 0)),
            pl.BlockSpec((1, Cz), lambda b, q: (0, 0)),
            pl.BlockSpec((1, Cz), lambda b, q: (0, 0)),
            pl.BlockSpec((H, Cz), lambda b, q: (0, 0)),
        ],
        out_specs=pl.BlockSpec((1, H, block_q, R), lambda b, q: (b, 0, q, 0)),
        compiler_params=pltpu.CompilerParams(
            dimension_semantics=("parallel", "parallel"),
            vmem_limit_bytes=vmem_limit),
        cost_estimate=bias_cost,
    )(pair_bf16, params["gamma_z"][None, :], params["beta_z"][None, :], w2dT)

    mask4 = msa_mask[:, :, None, :]                          # [B, S, 1, R]

    attn_cost = pl.CostEstimate(
        flops=int(B * S * (2 * R * Cm * 4 * Cm + 4 * H * R * R * d
                           + 2 * R * Cm * Cm)),
        transcendentals=int(B * S * (H * R * R + R * Cm + R)),
        bytes_accessed=int(2 * B * S * R * Cm * 4 + B * H * R * R * 2))

    kern = functools.partial(_msa_row_attn_kernel, num_head=H)
    out = pl.pallas_call(
        kern,
        out_shape=jax.ShapeDtypeStruct((B, S, R, Cm), jnp.float32),
        grid=(B, S),
        in_specs=[
            pl.BlockSpec((1, 1, R, Cm), lambda b, s: (b, s, 0, 0)),   # msa_act_raw
            pl.BlockSpec((1, 1, 1, R), lambda b, s: (b, s, 0, 0)),    # msa_mask
            pl.BlockSpec((1, H, R, R), lambda b, s: (b, 0, 0, 0)),    # pair bias (bf16)
            pl.BlockSpec((1, Cm), lambda b, s: (0, 0)),               # gamma_m
            pl.BlockSpec((1, Cm), lambda b, s: (0, 0)),               # beta_m
            pl.BlockSpec((Cm, 4 * Cm), lambda b, s: (0, 0)),          # W_qkv|W_gate (bf16)
            pl.BlockSpec((1, Cm), lambda b, s: (0, 0)),               # gating_bias
            pl.BlockSpec((Cm, Cm), lambda b, s: (0, 0)),              # W_o (bf16)
            pl.BlockSpec((1, Cm), lambda b, s: (0, 0)),               # out_bias
        ],
        out_specs=pl.BlockSpec((1, 1, R, Cm), lambda b, s: (b, s, 0, 0)),
        scratch_shapes=[pltpu.VMEM((R, Cm), jnp.bfloat16)],           # gated heads
        compiler_params=pltpu.CompilerParams(
            dimension_semantics=("parallel", "parallel"),
            vmem_limit_bytes=vmem_limit),
        cost_estimate=attn_cost,
    )(msa_raw, mask4, bias_bhqk,
      params["gamma_m"][None, :], params["beta_m"][None, :],
      wqkvg, params["gbias"][None, :], wo, params["obias"][None, :])
    return out


# ---------------------------------------------------------------------------
# Pure-JAX f32 reference (mirrors the PyTorch forward) for validation
# ---------------------------------------------------------------------------
def reference_forward(msa_raw, msa_mask, pair_act, params):
    def ln(x, g, b):
        m = x.mean(-1, keepdims=True)
        v = ((x - m) ** 2).mean(-1, keepdims=True)
        return (x - m) / jnp.sqrt(v + LN_EPS) * g + b

    H = params["num_head"]
    B, S, R, Cm = msa_raw.shape
    D = Cm // H
    scaling = 1.0 / math.sqrt(D)

    msa = ln(msa_raw, params["gamma_m"], params["beta_m"])
    pz = ln(pair_act, params["gamma_z"], params["beta_z"])
    nb = jnp.einsum("bqkc,ch->bqkh", pz, params["w2d"])
    nb = jnp.transpose(nb, (0, 3, 1, 2))                  # [B, H, Q, K]

    qkv = jnp.einsum("bsrc,cd->bsrd", msa, params["wqkv"])
    q, k, v = jnp.split(qkv, 3, axis=-1)

    def to_heads(t):
        return jnp.transpose(t.reshape(B, S, R, H, D), (0, 1, 3, 2, 4))

    q, k, v = to_heads(q), to_heads(k), to_heads(v)
    logits = jnp.einsum("bshqd,bshkd->bshqk", q, k) * scaling
    logits = logits + 1e9 * (msa_mask - 1.0)[:, :, None, None, :] + nb[:, None]
    w = jax.nn.softmax(logits, axis=-1)
    wa = jnp.einsum("bshqk,bshkd->bshqd", w, v)
    wa = jnp.transpose(wa, (0, 1, 3, 2, 4)).reshape(B, S, R, Cm)
    gate = jax.nn.sigmoid(
        jnp.einsum("bsrc,cd->bsrd", msa, params["wgate"]) + params["gbias"])
    wa = gate * wa
    out = jnp.einsum("bsrc,cd->bsrd", wa, params["wo"])
    return msa_raw + out + params["obias"]


if __name__ == "__main__":
    B, S, R = 2, 4, 8          # batch, MSA rows, residues
    Cm, Cz, H = 16, 8, 4       # msa_dim, pair_dim, num_head

    key = jax.random.PRNGKey(0)
    ks = jax.random.split(key, 12)

    params = {
        "num_head": H,
        "gamma_m": 1.0 + 0.1 * jax.random.normal(ks[0], (Cm,), jnp.float32),
        "beta_m": 0.1 * jax.random.normal(ks[1], (Cm,), jnp.float32),
        "gamma_z": 1.0 + 0.1 * jax.random.normal(ks[2], (Cz,), jnp.float32),
        "beta_z": 0.1 * jax.random.normal(ks[3], (Cz,), jnp.float32),
        "w2d": 0.1 * jax.random.normal(ks[4], (Cz, H), jnp.float32),
        "wqkv": 0.1 * jax.random.normal(ks[5], (Cm, 3 * Cm), jnp.float32),
        "wgate": 0.1 * jax.random.normal(ks[6], (Cm, Cm), jnp.float32),
        "gbias": jnp.ones((Cm,), jnp.float32),            # gating_bias init = ones
        "wo": 0.1 * jax.random.normal(ks[7], (Cm, Cm), jnp.float32),
        "obias": jnp.zeros((Cm,), jnp.float32),           # out_bias init = zeros
    }

    msa_raw = jax.random.normal(ks[8], (B, S, R, Cm), jnp.float32)
    pair_act = jax.random.normal(ks[9], (B, R, R, Cz), jnp.float32)
    msa_mask = (jax.random.uniform(ks[10], (B, S, R)) > 0.2).astype(jnp.float32)

    out = msa_row_attention_with_pair_bias(msa_raw, msa_mask, pair_act, params)
    out = jax.block_until_ready(out)

    ref = jax.block_until_ready(reference_forward(msa_raw, msa_mask, pair_act, params))
    # bf16 matmul operands, bf16 pair_act read + approx reciprocal -> loose tol
    np.testing.assert_allclose(np.asarray(out), np.asarray(ref), rtol=3e-2, atol=3e-2)

    print("KERNEL_OK")
</pallas_src>

<mosaic_0001>
module attributes {stable_mosaic.version = 11 : i64} {
  func.func @_pair_bias_kernel(%arg0: i32, %arg1: i32, %arg2: memref<1x8x8x8xbf16, #tpu.memory_space<vmem>>, %arg3: memref<1x8xf32, #tpu.memory_space<vmem>>, %arg4: memref<1x8xf32, #tpu.memory_space<vmem>>, %arg5: memref<4x8xbf16, #tpu.memory_space<vmem>>, %arg6: memref<1x4x8x8xbf16, #tpu.memory_space<vmem>>) attributes {dimension_semantics = [#tpu.dimension_semantics<parallel>, #tpu.dimension_semantics<parallel>], iteration_bounds = array<i64: 2, 1>, scalar_prefetch = 0 : i64, scratch_operands = 0 : i64, tpu.core_type = #tpu.core_type<tc>, window_params = [{transform_indices = @transform_0, window_bounds = array<i64: 1, 8, 8, 8>}, {pipeline_mode = #tpu.pipeline_mode<synchronous>, transform_indices = @transform_1, window_bounds = array<i64: 1, 8>}, {pipeline_mode = #tpu.pipeline_mode<synchronous>, transform_indices = @transform_2, window_bounds = array<i64: 1, 8>}, {pipeline_mode = #tpu.pipeline_mode<synchronous>, transform_indices = @transform_3, window_bounds = array<i64: 4, 8>}, {transform_indices = @transform_4, window_bounds = array<i64: 1, 4, 8, 8>}]} {
    %c0 = arith.constant 0 : index
    %c0_0 = arith.constant 0 : index
    %c0_1 = arith.constant 0 : index
    %c0_2 = arith.constant 0 : index
    %0 = vector.load %arg2[%c0, %c0_0, %c0_1, %c0_2] : memref<1x8x8x8xbf16, #tpu.memory_space<vmem>>, vector<1x8x8x8xbf16>
    %1 = vector.shape_cast %0 : vector<1x8x8x8xbf16> to vector<8x8x8xbf16>
    %2 = arith.extf %1 : vector<8x8x8xbf16> to vector<8x8x8xf32>
    %cst = arith.constant dense<0.000000e+00> : vector<8x8xf32>
    %3 = vector.multi_reduction <add>, %2, %cst [2] : vector<8x8x8xf32> to vector<8x8xf32>
    %4 = vector.shape_cast %3 : vector<8x8xf32> to vector<8x8x1xf32>
    %cst_3 = arith.constant 8.000000e+00 : f32
    %5 = vector.broadcast %cst_3 : f32 to vector<8x8x1xf32>
    %6 = arith.divf %4, %5 : vector<8x8x1xf32>
    %7 = vector.broadcast %6 : vector<8x8x1xf32> to vector<8x8x8xf32>
    %8 = arith.subf %2, %7 : vector<8x8x8xf32>
    %9 = arith.mulf %8, %8 : vector<8x8x8xf32>
    %cst_4 = arith.constant dense<0.000000e+00> : vector<8x8xf32>
    %10 = vector.multi_reduction <add>, %9, %cst_4 [2] : vector<8x8x8xf32> to vector<8x8xf32>
    %11 = vector.shape_cast %10 : vector<8x8xf32> to vector<8x8x1xf32>
    %cst_5 = arith.constant 8.000000e+00 : f32
    %12 = vector.broadcast %cst_5 : f32 to vector<8x8x1xf32>
    %13 = arith.divf %11, %12 : vector<8x8x1xf32>
    %14 = vector.broadcast %6 : vector<8x8x1xf32> to vector<8x8x8xf32>
    %15 = arith.subf %2, %14 : vector<8x8x8xf32>
    %cst_6 = arith.constant 9.99999974E-6 : f32
    %16 = vector.broadcast %cst_6 : f32 to vector<8x8x1xf32>
    %17 = arith.addf %13, %16 : vector<8x8x1xf32>
    %18 = math.rsqrt %17 : vector<8x8x1xf32>
    %19 = vector.broadcast %18 : vector<8x8x1xf32> to vector<8x8x8xf32>
    %20 = arith.mulf %15, %19 : vector<8x8x8xf32>
    %c0_7 = arith.constant 0 : index
    %c0_8 = arith.constant 0 : index
    %21 = vector.load %arg3[%c0_7, %c0_8] : memref<1x8xf32, #tpu.memory_space<vmem>>, vector<1x8xf32>
    %22 = vector.shape_cast %21 : vector<1x8xf32> to vector<8xf32>
    %23 = vector.shape_cast %22 : vector<8xf32> to vector<1x1x8xf32>
    %24 = vector.broadcast %23 : vector<1x1x8xf32> to vector<8x8x8xf32>
    %25 = arith.mulf %20, %24 : vector<8x8x8xf32>
    %c0_9 = arith.constant 0 : index
    %c0_10 = arith.constant 0 : index
    %26 = vector.load %arg4[%c0_9, %c0_10] : memref<1x8xf32, #tpu.memory_space<vmem>>, vector<1x8xf32>
    %27 = vector.shape_cast %26 : vector<1x8xf32> to vector<8xf32>
    %28 = vector.shape_cast %27 : vector<8xf32> to vector<1x1x8xf32>
    %29 = vector.broadcast %28 : vector<1x1x8xf32> to vector<8x8x8xf32>
    %30 = arith.addf %25, %29 : vector<8x8x8xf32>
    %31 = vector.shape_cast %30 : vector<8x8x8xf32> to vector<64x8xf32>
    %32 = arith.truncf %31 : vector<64x8xf32> to vector<64x8xbf16>
    %c0_11 = arith.constant 0 : index
    %c0_12 = arith.constant 0 : index
    %33 = vector.load %arg5[%c0_11, %c0_12] : memref<4x8xbf16, #tpu.memory_space<vmem>>, vector<4x8xbf16>
    %cst_13 = arith.constant dense<0.000000e+00> : vector<4x64xf32>
    %34 = tpu.matmul %33, %32, %cst_13 {dimension_numbers = #tpu.dot_dimension_numbers<[1], [1], [0], [0], [0, 0, 1, 0], [], []>} : vector<4x8xbf16>, vector<64x8xbf16>, vector<4x64xf32> -> vector<4x64xf32>
    %35 = vector.shape_cast %34 : vector<4x64xf32> to vector<4x8x8xf32>
    %36 = arith.truncf %35 : vector<4x8x8xf32> to vector<4x8x8xbf16>
    %c0_14 = arith.constant 0 : index
    %c0_15 = arith.constant 0 : index
    %c0_16 = arith.constant 0 : index
    %c0_17 = arith.constant 0 : index
    %37 = vector.load %arg6[%c0_14, %c0_15, %c0_16, %c0_17] : memref<1x4x8x8xbf16, #tpu.memory_space<vmem>>, vector<1x4x8x8xbf16>
    %38 = vector.shape_cast %37 : vector<1x4x8x8xbf16> to vector<4x8x8xbf16>
    %39 = vector.shape_cast %36 : vector<4x8x8xbf16> to vector<1x4x8x8xbf16>
    tpu.vector_store %arg6[%c0_14, %c0_15, %c0_16, %c0_17], %39 {strides = array<i32>} : memref<1x4x8x8xbf16, #tpu.memory_space<vmem>>, vector<1x4x8x8xbf16>,
    return
  }
  func.func @transform_0(%arg0: i32, %arg1: i32) -> (i32, i32, i32, i32) {
    %c0_i32 = arith.constant 0 : i32
    %c0_i32_0 = arith.constant 0 : i32
    %c0_i32_1 = arith.constant 0 : i32
    return %arg0, %arg1, %c0_i32, %c0_i32_0 : i32, i32, i32, i32
  }
  func.func @transform_1(%arg0: i32, %arg1: i32) -> (i32, i32) {
    %c0_i32 = arith.constant 0 : i32
    %c0_i32_0 = arith.constant 0 : i32
    %c0_i32_1 = arith.constant 0 : i32
    return %c0_i32, %c0_i32_0 : i32, i32
  }
  func.func @transform_2(%arg0: i32, %arg1: i32) -> (i32, i32) {
    %c0_i32 = arith.constant 0 : i32
    %c0_i32_0 = arith.constant 0 : i32
    %c0_i32_1 = arith.constant 0 : i32
    return %c0_i32, %c0_i32_0 : i32, i32
  }
  func.func @transform_3(%arg0: i32, %arg1: i32) -> (i32, i32) {
    %c0_i32 = arith.constant 0 : i32
    %c0_i32_0 = arith.constant 0 : i32
    %c0_i32_1 = arith.constant 0 : i32
    return %c0_i32, %c0_i32_0 : i32, i32
  }
  func.func @transform_4(%arg0: i32, %arg1: i32) -> (i32, i32, i32, i32) {
    %c0_i32 = arith.constant 0 : i32
    %c0_i32_0 = arith.constant 0 : i32
    %c0_i32_1 = arith.constant 0 : i32
    return %arg0, %c0_i32, %arg1, %c0_i32_0 : i32, i32, i32, i32
  }
}

</mosaic_0001>

<llo_original>
// kernel: tpu_custom_call.1
$region0: #{tpu_custom_call.1}
  #allocation0 [shape = 'u32[]', space=smem, size = 0x4, offset = 0x4, fixed_abs, tag = 'smem constant byte address 0x4 - core index']
  #allocation1 [shape = 'u32[144,128]{1,0:T(1,128)}', space=vmem, size = 0x12000, scoped, tag = 'internal scratch']
  %s0 = inlined_call_operand.hbm [shape: bf16[2,8,8,8], index: 0, kind: input, shape index: {}]
  %s1 = inlined_call_operand.vmem [shape: f32[1,8], index: 1, kind: input, shape index: {}]
  %s2 = inlined_call_operand.vmem [shape: f32[1,8], index: 2, kind: input, shape index: {}]
  %s3 = inlined_call_operand.vmem [shape: bf16[4,8], index: 3, kind: input, shape index: {}]
  %s4 = inlined_call_operand.hbm [shape: bf16[2,4,8,8], index: 4, kind: output, shape index: {}]
  %s5 = sld [smem:[#allocation0]]
  $region53: #{tpu_custom_call.1} parent=0
    _
  %s7 = ssub.s32 1, %s5
  %s8 = scalar_select 0, %s7, %s5
  $region1: #{tpu_custom_call.1} parent=0
    #allocation2 [shape = 'u8[32768]{0}', space=vmem, size = 0x8000, scoped, tag = 'input window, operand 0']
    #allocation3 [shape = 's32[2]{0}', space=sflag, size = 0x8, scoped, tag = 'scoped memory for tpu_custom_call.1']
    #allocation4 [shape = 's32[2]{0}', space=sflag, size = 0x8, scoped, tag = 'scoped memory for tpu_custom_call.1']
    #allocation5 [shape = 'u8[16384]{0}', space=vmem, size = 0x4000, scoped, tag = 'output window, operand 0']
    %9 = vsyncpa [#allocation3], 0
    %s10 = scalar_lea.sflag [#allocation3], 1
    %11 = vsyncpa %s10, 0
    %12 = vsyncpa [#allocation4], 0
    %s13 = scalar_lea.sflag [#allocation4], 1
    %14 = vsyncpa %s13, 0
    loop: start=0, step=1, limit=4
    $region2: #{tpu_custom_call.1} parent=1 // loop_pre_header
      _
    $region3: #{tpu_custom_call.1} parent=1 // loop_header
      %s16 = sphi 0, %s20
      %p17 = scmp.ge.s32.totalorder %s16, 4
      %s23 = sphi 0, %s35
      %s24 = sphi 0, %s31
      %s25 = sphi 0, %s23
      %s26 = sphi 0, %s24
      %s27 = sphi 0, %s25
      %s28 = sphi 0, %s26
      %s40 = sphi 0, %s42
      %s43 = sphi 0, %s40
      %s44 = sphi 0, %s43
      %s60 = sphi 0, %s44
      %s64 = sphi 0, %s64
      %s66 = sphi 0, %s64
      %s67 = sphi 0, %s66
      %s81 = sphi 0, %s67
      %s85 = sphi 0, %s85
      %s87 = sphi 0, %s85
      %s88 = sphi 0, %s87
      %s102 = sphi 0, %s88
      %s106 = sphi 0, %s106
      %s108 = sphi 0, %s106
      %s109 = sphi 0, %s108
      %s123 = sphi 0, %s109
      %s131 = sphi 0, %s133
      %s134 = sphi 0, %s131
      %s135 = sphi 0, %s134
      %s151 = sphi 0, %s135
    $region4: #{tpu_custom_call.1} parent=1 // loop_header_branch
      %19 = sbr.rel (%p17) target = $region8
    $region5: #{tpu_custom_call.1} parent=1 // loop_body
      %s21 = ssub.s32 %s16, 1
      %s22 = ssub.s32 %s16, 2
      %s29 = sadd.s32 1, %s24
      %p30 = scmp.ge.s32.totalorder %s29, 1
      %s31 = scalar_select %p30, 0, %s29
      %s32 = sadd.s32 1, %s23
      %s33 = scalar_select %p30, %s32, %s23
      %p34 = scmp.ge.s32.totalorder %s33, 2
      %s35 = scalar_select %p34, 0, %s33
      %s36 = ssub.s32 %s23, %s35
      %s37 = ssub.s32 %s24, %s31
      %s38 = sor.u32 %s36, %s37
      %p39 = scmp.eq.s32.totalorder %s38, 0
      %s41 = sadd.s32 %s40, 1
      %s42 = scalar_select %p39, %s40, %s41
      %p45 = pneg %p39
      %p46 = scmp.eq.s32.totalorder %s16, 1
      %p47 = por %p45, %p46
      %p48 = scmp.ne.s32.totalorder %s40, %s43
      %p49 = scmp.eq.s32.totalorder %s16, 0
      %p50 = por %p48, %p49
      %p51 = scmp.ne.s32.totalorder %s40, %s43
      %p52 = scmp.eq.s32.totalorder %s21, 1
      %p53 = por %p51, %p52
      %p54 = scmp.ne.s32.totalorder %s43, %s44
      %p55 = scmp.eq.s32.totalorder %s21, 0
      %p56 = por %p54, %p55
      %p57 = scmp.ne.s32.totalorder %s43, %s44
      %p58 = scmp.eq.s32.totalorder %s22, 1
      %p59 = por %p57, %p58
      %p61 = scmp.ne.s32.totalorder %s44, %s60
      %p62 = scmp.eq.s32.totalorder %s22, 0
      %p63 = por %p61, %p62
      %s65 = sadd.s32 %s64, 1
      %p68 = scmp.eq.s32.totalorder %s16, 1
      %p69 = scmp.ne.s32.totalorder %s64, %s66
      %p70 = scmp.eq.s32.totalorder %s16, 0
      %p71 = por %p69, %p70
      %p72 = scmp.ne.s32.totalorder %s64, %s66
      %p73 = scmp.eq.s32.totalorder %s21, 1
      %p74 = por %p72, %p73
      %p75 = scmp.ne.s32.totalorder %s66, %s67
      %p76 = scmp.eq.s32.totalorder %s21, 0
      %p77 = por %p75, %p76
      %p78 = scmp.ne.s32.totalorder %s66, %s67
      %p79 = scmp.eq.s32.totalorder %s22, 1
      %p80 = por %p78, %p79
      %p82 = scmp.ne.s32.totalorder %s67, %s81
      %p83 = scmp.eq.s32.totalorder %s22, 0
      %p84 = por %p82, %p83
      %s86 = sadd.s32 %s85, 1
      %p89 = scmp.eq.s32.totalorder %s16, 1
      %p90 = scmp.ne.s32.totalorder %s85, %s87
      %p91 = scmp.eq.s32.totalorder %s16, 0
      %p92 = por %p90, %p91
      %p93 = scmp.ne.s32.totalorder %s85, %s87
      %p94 = scmp.eq.s32.totalorder %s21, 1
      %p95 = por %p93, %p94
      %p96 = scmp.ne.s32.totalorder %s87, %s88
      %p97 = scmp.eq.s32.totalorder %s21, 0
      %p98 = por %p96, %p97
      %p99 = scmp.ne.s32.totalorder %s87, %s88
      %p100 = scmp.eq.s32.totalorder %s22, 1
      %p101 = por %p99, %p100
      %p103 = scmp.ne.s32.totalorder %s88, %s102
      %p104 = scmp.eq.s32.totalorder %s22, 0
      %p105 = por %p103, %p104
      %s107 = sadd.s32 %s106, 1
      %p110 = scmp.eq.s32.totalorder %s16, 1
      %p111 = scmp.ne.s32.totalorder %s106, %s108
      %p112 = scmp.eq.s32.totalorder %s16, 0
      %p113 = por %p111, %p112
      %p114 = scmp.ne.s32.totalorder %s106, %s108
      %p115 = scmp.eq.s32.totalorder %s21, 1
      %p116 = por %p114, %p115
      %p117 = scmp.ne.s32.totalorder %s108, %s109
      %p118 = scmp.eq.s32.totalorder %s21, 0
      %p119 = por %p117, %p118
      %p120 = scmp.ne.s32.totalorder %s108, %s109
      %p121 = scmp.eq.s32.totalorder %s22, 1
      %p122 = por %p120, %p121
      %p124 = scmp.ne.s32.totalorder %s109, %s123
      %p125 = scmp.eq.s32.totalorder %s22, 0
      %p126 = por %p124, %p125
      %s127 = ssub.s32 %s23, %s35
      %s128 = ssub.s32 %s24, %s31
      %s129 = sor.u32 %s127, %s128
      %p130 = scmp.eq.s32.totalorder %s129, 0
      %s132 = sadd.s32 %s131, 1
      %s133 = scalar_select %p130, %s131, %s132
      %p136 = pneg %p130
      %p137 = scmp.eq.s32.totalorder %s16, 1
      %p138 = por %p136, %p137
      %p139 = scmp.ne.s32.totalorder %s131, %s134
      %p140 = scmp.eq.s32.totalorder %s16, 0
      %p141 = por %p139, %p140
      %p142 = scmp.ne.s32.totalorder %s131, %s134
      %p143 = scmp.eq.s32.totalorder %s21, 1
      %p144 = por %p142, %p143
      %p145 = scmp.ne.s32.totalorder %s134, %s135
      %p146 = scmp.eq.s32.totalorder %s21, 0
      %p147 = por %p145, %p146
      %p148 = scmp.ne.s32.totalorder %s134, %s135
      %p149 = scmp.eq.s32.totalorder %s22, 1
      %p150 = por %p148, %p149
      %p152 = scmp.ne.s32.totalorder %s135, %s151
      %p153 = scmp.eq.s32.totalorder %s22, 0
      %p154 = por %p152, %p153
      %p155 = scmp.le.s32.totalorder 1, %s16
      %p156 = scmp.lt.s32.totalorder %s16, 3
      %p157 = pnand %p155, %p156
      %p158 = pneg %p157
      // Predicated region
      $region9: #{tpu_custom_call.1} parent=5 // pred_check
        _
      $region10: #{tpu_custom_call.1} parent=5 // pred_check_branch
        %160 = sbr.rel (%p157) target = $region12
      $region11: #{tpu_custom_call.1} parent=5 // pred_region
        %s161 = ssub.s32 %s16, 1
        // Predicated region
        $region13: #{tpu_custom_call.1} parent=11 // pred_check
          %p162 = pneg %p77
        $region14: #{tpu_custom_call.1} parent=11 // pred_check_branch
          %164 = sbr.rel (%p162) target = $region16
        $region15: #{tpu_custom_call.1} parent=11 // pred_region
          _
        $region16: #{tpu_custom_call.1} parent=11 // pred_fallthru
          _
        // Predicated region
        $region17: #{tpu_custom_call.1} parent=11 // pred_check
          %p165 = pneg %p98
        $region18: #{tpu_custom_call.1} parent=11 // pred_check_branch
          %167 = sbr.rel (%p165) target = $region20
        $region19: #{tpu_custom_call.1} parent=11 // pred_region
          _
        $region20: #{tpu_custom_call.1} parent=11 // pred_fallthru
          _
        // Predicated region
        $region21: #{tpu_custom_call.1} parent=11 // pred_check
          %p168 = pneg %p119
        $region22: #{tpu_custom_call.1} parent=11 // pred_check_branch
          %170 = sbr.rel (%p168) target = $region24
        $region23: #{tpu_custom_call.1} parent=11 // pred_region
          _
        $region24: #{tpu_custom_call.1} parent=11 // pred_fallthru
          _
      $region12: #{tpu_custom_call.1} parent=5 // pred_fallthru
        _
      %p171 = scmp.lt.s32.totalorder %s16, 2
      // Predicated region
      $region25: #{tpu_custom_call.1} parent=5 // pred_check
        %p172 = pneg %p171
      $region26: #{tpu_custom_call.1} parent=5 // pred_check_branch
        %174 = sbr.rel (%p172) target = $region28
      $region27: #{tpu_custom_call.1} parent=5 // pred_region
        // Predicated region
        $region29: #{tpu_custom_call.1} parent=27 // pred_check
          %p175 = pneg %p50
        $region30: #{tpu_custom_call.1} parent=27 // pred_check_branch
          %177 = sbr.rel (%p175) target = $region32
        $region31: #{tpu_custom_call.1} parent=27 // pred_region
          %s178 = sand.u32 %s40, 1
          %s179 = scalar_lea.sflag [#allocation3], %s178
          %s180 = sand.u32 %s40, 1
          %s181 = smul.addr %s180, 32
          %s182 = scalar_lea.vmem [#allocation2], %s181
          %s183 = smul.u32 8, %s24
          %s185 = ssub.s32 512, 512
          %186 = vsyncadd %s179, %s185
          %s187 = smul.addr %s23, 8
          %s188 = sadd.s32 %s183, %s187
          %s189 = smul.addr %s188, 64
          %s190 = scalar_lea.hbm %s0, %s189
          %s191 = sshll.u32 %s182, 4
          %s192 = int_to_ptr.vmem [resolvable:$true] %s191
          %197 = dma.hbm_to_vmem [thread:$0]  %s190, 512, %s192, %s179, 64, 64, 4
        $region32: #{tpu_custom_call.1} parent=27 // pred_fallthru
          _
      $region28: #{tpu_custom_call.1} parent=5 // pred_fallthru
        _
      %p198 = scmp.le.s32.totalorder 1, %s16
      %p199 = scmp.lt.s32.totalorder %s16, 3
      %p200 = pnand %p198, %p199
      %p201 = pneg %p200
      // Predicated region
      $region33: #{tpu_custom_call.1} parent=5 // pred_check
        _
      $region34: #{tpu_custom_call.1} parent=5 // pred_check_branch
        %203 = sbr.rel (%p200) target = $region36
      $region35: #{tpu_custom_call.1} parent=5 // pred_region
        %s204 = ssub.s32 %s16, 1
        %s205 = sand.u32 %s43, 1
        %s206 = scalar_lea.sflag [#allocation3], %s205
        %s207 = sand.u32 %s43, 1
        %s208 = smul.addr %s207, 32
        %s209 = scalar_lea.vmem [#allocation2], %s208
        // Predicated region
        $region37: #{tpu_custom_call.1} parent=35 // pred_check
          %p210 = pneg %p56
        $region38: #{tpu_custom_call.1} parent=35 // pred_check_branch
          %212 = sbr.rel (%p210) target = $region40
        $region39: #{tpu_custom_call.1} parent=35 // pred_region
          %213 = dma.done %s206, 512
        $region40: #{tpu_custom_call.1} parent=35 // pred_fallthru
          _
        %s214 = sand.u32 %s43, 1
        %s215 = scalar_lea.sflag [#allocation3], %s214
        %s216 = sand.u32 %s43, 1
        %s217 = smul.addr %s216, 32
        %s218 = scalar_lea.vmem [#allocation2], %s217
        %p219 = pneg %p56
        %p220 = pneg %p53
        %p221 = pneg %p77
        %p222 = pneg %p74
        %p223 = pneg %p98
        %p224 = pneg %p95
        %p225 = pneg %p119
        %p226 = pneg %p116
        %p227 = pneg %p147
        %p228 = pneg %p144
        %s229 = sand.u32 %s134, 1
        %s230 = scalar_lea.sflag [#allocation4], %s229
        %s231 = sand.u32 %s134, 1
        %s232 = smul.addr %s231, 16
        %s233 = scalar_lea.vmem [#allocation5], %s232
        %s234 = smul.u32 8, %s26
        %v236 = vld [vmem:[%s209] sm:$0xf]
        %v237 = vld [vmem:[%s209 + $0x4] sm:$0xf]
        %v238 = vld [vmem:[%s209 + $0x8] sm:$0xf]
        %v239 = vld [vmem:[%s209 + $0xc] sm:$0xf]
        %v240 = vld [vmem:[%s209 + $0x10] sm:$0xf]
        %v241 = vld [vmem:[%s209 + $0x14] sm:$0xf]
        %v242 = vld [vmem:[%s209 + $0x18] sm:$0xf]
        %v243 = vld [vmem:[%s209 + $0x1c] sm:$0xf]
        %v244 = vunpack.c.l.bf16 %v236
        %v245 = vunpack.c.l.bf16 %v237
        %v246 = vunpack.c.l.bf16 %v238
        %v247 = vunpack.c.l.bf16 %v239
        %v248 = vunpack.c.l.bf16 %v240
        %v249 = vunpack.c.l.bf16 %v241
        %v250 = vunpack.c.l.bf16 %v242
        %v251 = vunpack.c.l.bf16 %v243
        %vm252 = vcmask 64512
        %v253 = vsel %vm252, %v244, 0.0
        %254 = vadd.xlane.f32.xlu0 %v253
        %v255 = vpop.xlane.xlu0 %254
        %v256 = vsel %vm252, %v245, 0.0
        %257 = vadd.xlane.f32.xlu0 %v256
        %v258 = vpop.xlane.xlu0 %257
        %v259 = vsel %vm252, %v246, 0.0
        %260 = vadd.xlane.f32.xlu0 %v259
        %v261 = vpop.xlane.xlu0 %260
        %v262 = vsel %vm252, %v247, 0.0
        %263 = vadd.xlane.f32.xlu0 %v262
        %v264 = vpop.xlane.xlu0 %263
        %v265 = vsel %vm252, %v248, 0.0
        %266 = vadd.xlane.f32.xlu0 %v265
        %v267 = vpop.xlane.xlu0 %266
        %v268 = vsel %vm252, %v249, 0.0
        %269 = vadd.xlane.f32.xlu0 %v268
        %v270 = vpop.xlane.xlu0 %269
        %v271 = vsel %vm252, %v250, 0.0
        %272 = vadd.xlane.f32.xlu0 %v271
        %v273 = vpop.xlane.xlu0 %272
        %v274 = vsel %vm252, %v251, 0.0
        %275 = vadd.xlane.f32.xlu0 %v274
        %v276 = vpop.xlane.xlu0 %275
        %v277 = vrcp.pop 8.0
        %v278 = vmul.f32 %v255, %v277
        %v279 = vmul.f32 %v258, %v277
        %v280 = vmul.f32 %v261, %v277
        %v281 = vmul.f32 %v264, %v277
        %v282 = vmul.f32 %v267, %v277
        %v283 = vmul.f32 %v270, %v277
        %v284 = vmul.f32 %v273, %v277
        %v285 = vmul.f32 %v276, %v277
        %v286 = vsub.f32 %v244, %v278
        %v287 = vsub.f32 %v245, %v279
        %v288 = vsub.f32 %v246, %v280
        %v289 = vsub.f32 %v247, %v281
        %v290 = vsub.f32 %v248, %v282
        %v291 = vsub.f32 %v249, %v283
        %v292 = vsub.f32 %v250, %v284
        %v293 = vsub.f32 %v251, %v285
        %v294 = vmul.f32 %v286, %v286
        %v295 = vmul.f32 %v287, %v287
        %v296 = vmul.f32 %v288, %v288
        %v297 = vmul.f32 %v289, %v289
        %v298 = vmul.f32 %v290, %v290
        %v299 = vmul.f32 %v291, %v291
        %v300 = vmul.f32 %v292, %v292
        %v301 = vmul.f32 %v293, %v293
        %v302 = vsel %vm252, %v294, 0.0
        %303 = vadd.xlane.f32.xlu0 %v302
        %v304 = vpop.xlane.xlu0 %303
        %v305 = vsel %vm252, %v295, 0.0
        %306 = vadd.xlane.f32.xlu0 %v305
        %v307 = vpop.xlane.xlu0 %306
        %v308 = vsel %vm252, %v296, 0.0
        %309 = vadd.xlane.f32.xlu0 %v308
        %v310 = vpop.xlane.xlu0 %309
        %v311 = vsel %vm252, %v297, 0.0
        %312 = vadd.xlane.f32.xlu0 %v311
        %v313 = vpop.xlane.xlu0 %312
        %v314 = vsel %vm252, %v298, 0.0
        %315 = vadd.xlane.f32.xlu0 %v314
        %v316 = vpop.xlane.xlu0 %315
        %v317 = vsel %vm252, %v299, 0.0
        %318 = vadd.xlane.f32.xlu0 %v317
        %v319 = vpop.xlane.xlu0 %318
        %v320 = vsel %vm252, %v300, 0.0
        %321 = vadd.xlane.f32.xlu0 %v320
        %v322 = vpop.xlane.xlu0 %321
        %v323 = vsel %vm252, %v301, 0.0
        %324 = vadd.xlane.f32.xlu0 %v323
        %v325 = vpop.xlane.xlu0 %324
        %v326 = vmul.f32 %v304, %v277
        %v327 = vmul.f32 %v307, %v277
        %v328 = vmul.f32 %v310, %v277
        %v329 = vmul.f32 %v313, %v277
        %v330 = vmul.f32 %v316, %v277
        %v331 = vmul.f32 %v319, %v277
        %v332 = vmul.f32 %v322, %v277
        %v333 = vmul.f32 %v325, %v277
        %v334 = vadd.f32 %v326, 1e-05
        %v335 = vadd.f32 %v327, 1e-05
        %v336 = vadd.f32 %v328, 1e-05
        %v337 = vadd.f32 %v329, 1e-05
        %v338 = vadd.f32 %v330, 1e-05
        %v339 = vadd.f32 %v331, 1e-05
        %v340 = vadd.f32 %v332, 1e-05
        %v341 = vadd.f32 %v333, 1e-05
        %v342 = vrsqrt.pop %v334
        %v343 = vrsqrt.pop %v335
        %v344 = vrsqrt.pop %v336
        %v345 = vrsqrt.pop %v337
        %v346 = vrsqrt.pop %v338
        %v347 = vrsqrt.pop %v339
        %v348 = vrsqrt.pop %v340
        %v349 = vrsqrt.pop %v341
        %v350 = vmul.f32 %v286, %v342
        %v351 = vmul.f32 %v287, %v343
        %v352 = vmul.f32 %v288, %v344
        %v353 = vmul.f32 %v289, %v345
        %v354 = vmul.f32 %v290, %v346
        %v355 = vmul.f32 %v291, %v347
        %v356 = vmul.f32 %v292, %v348
        %v357 = vmul.f32 %v293, %v349
        %v358 = vld [vmem:[%s1] sm:$0x1]
        %v360 = vlaneseq
        %v361 = vshrl.u32 %v360, 7
        %v362 = vsub.s32 0, %v361
        %v363 = vrot.slane %v358, %v362
        %v365 = vmul.f32 %v350, %v363
        %v366 = vmul.f32 %v351, %v363
        %v367 = vmul.f32 %v352, %v363
        %v368 = vmul.f32 %v353, %v363
        %v369 = vmul.f32 %v354, %v363
        %v370 = vmul.f32 %v355, %v363
        %v371 = vmul.f32 %v356, %v363
        %v372 = vmul.f32 %v357, %v363
        %v373 = vld [vmem:[%s2] sm:$0x1]
        %v375 = vlaneseq
        %v376 = vshrl.u32 %v375, 7
        %v377 = vsub.s32 0, %v376
        %v378 = vrot.slane %v373, %v377
        %v380 = vadd.f32 %v365, %v378
        %v381 = vadd.f32 %v366, %v378
        %v382 = vadd.f32 %v367, %v378
        %v383 = vadd.f32 %v368, %v378
        %v384 = vadd.f32 %v369, %v378
        %v385 = vadd.f32 %v370, %v378
        %v386 = vadd.f32 %v371, %v378
        %v387 = vadd.f32 %v372, %v378
        %v388 = vpack.c.bf16 %v381, %v380
        %v389 = vpack.c.bf16 %v383, %v382
        %v390 = vpack.c.bf16 %v385, %v384
        %v391 = vpack.c.bf16 %v387, %v386
        %v392 = vld [vmem:[%s3] sm:$0x3]
        %v394 = vsel %vm252, %v392, 0
        %v397 = vsel %vm252, %v388, 0
        %v400 = vsel %vm252, %v389, 0
        %v403 = vsel %vm252, %v390, 0
        %v406 = vsel %vm252, %v391, 0
        %408 = vmatprep.subr.bf16.mxu0 0
        %409 = vmatpush1.bf16.xpose.msra.mxu0 %v397
        %410 = vmatprep.subr.bf16.mxu0 0
        %411 = vmatpush1.bf16.xpose.msra.mxu0 %v400
        %412 = vmatprep.subr.bf16.mxu0 0
        %413 = vmatpush1.bf16.xpose.msra.mxu0 %v403
        %414 = vmatprep.subr.bf16.mxu0 0
        %415 = vmatpush1.bf16.xpose.msra.mxu0 %v406
        %416 = vmatprep.subr.bf16.mxu0 0
        %417 = vmatpush1.bf16.xpose.msra.mxu0 0
        %418 = vmatprep.subr.bf16.mxu0 0
        %419 = vmatpush1.bf16.xpose.msra.mxu0 0
        %420 = vmatprep.subr.bf16.mxu0 0
        %421 = vmatpush1.bf16.xpose.msra.mxu0 0
        %422 = vmatprep.subr.bf16.mxu0 0
        %423 = vmatpush1.bf16.xpose.msra.mxu0 0
        %424 = vmatprep.subr.bf16.mxu0 0
        %425 = vmatpush1.bf16.xpose.msra.mxu0 0
        %426 = vmatprep.subr.bf16.mxu0 0
        %427 = vmatpush1.bf16.xpose.msra.mxu0 0
        %428 = vmatprep.subr.bf16.mxu0 0
        %429 = vmatpush1.bf16.xpose.msra.mxu0 0
        %430 = vmatprep.subr.bf16.mxu0 0
        %431 = vmatpush1.bf16.xpose.msra.mxu0 0
        %432 = vmatprep.subr.bf16.mxu0 0
        %433 = vmatpush1.bf16.xpose.msra.mxu0 0
        %434 = vmatprep.subr.bf16.mxu0 0
        %435 = vmatpush1.bf16.xpose.msra.mxu0 0
        %436 = vmatprep.subr.bf16.mxu0 0
        %437 = vmatpush1.bf16.xpose.msra.mxu0 0
        %438 = vmatprep.subr.bf16.mxu0 0
        %439 = vmatpush1.bf16.xpose.msra.mxu0 0
        %440 = vmatprep.mubr.bf16.mxu0 0
        %441 = vmatmul.mubr.bf16.gmra.mrb[0].mxu0 %v394
        %v442 = vpop.f32.mrb[0].mxu0
        %v443 = vadd.f32 0.0, %v442
        %v444 = vpop.f32.mrb[0].mxu0
        %v445 = vpop.f32.mrb[0].mxu0
        %v446 = vpop.f32.mrb[0].mxu0
        %447 = vdwg.mxu0
        %449 = vrot.lane.b32.xlu0 %v443, 120
        %v450 = vpop.permute.xlu0 %449
        %452 = vrot.lane.b32.xlu0 %v443, 112
        %v453 = vpop.permute.xlu0 %452
        %455 = vrot.lane.b32.xlu0 %v443, 104
        %v456 = vpop.permute.xlu0 %455
        %458 = vrot.lane.b32.xlu0 %v443, 96
        %v459 = vpop.permute.xlu0 %458
        %461 = vrot.lane.b32.xlu0 %v443, 88
        %v462 = vpop.permute.xlu0 %461
        %464 = vrot.lane.b32.xlu0 %v443, 80
        %v465 = vpop.permute.xlu0 %464
        %467 = vrot.lane.b32.xlu0 %v443, 72
        %v468 = vpop.permute.xlu0 %467
        %v470 = vcombine.low %v443, %v453
        %v472 = vunpack.c.l.s4 1983009808
        %v473 = vunpack.c.0.s8 %v472
        %v474 = vlaneseq
        %v475 = vshrl.u32 %v474, 7
        %v476 = vsub.s32 %v473, %v475
        %v477 = vrot.slane %v470, %v476
        %v478 = vcombine.low %v450, %v456
        %v480 = vunpack.c.l.s4 1983009808
        %v481 = vunpack.c.0.s8 %v480
        %v482 = vlaneseq
        %v483 = vshrl.u32 %v482, 7
        %v484 = vsub.s32 %v481, %v483
        %v485 = vrot.slane %v478, %v484
        %v486 = vcombine.low %v459, %v465
        %v488 = vunpack.c.l.s4 1983009808
        %v489 = vunpack.c.0.s8 %v488
        %v490 = vlaneseq
        %v491 = vshrl.u32 %v490, 7
        %v492 = vsub.s32 %v489, %v491
        %v493 = vrot.slane %v486, %v492
        %v494 = vcombine.low %v462, %v468
        %v496 = vunpack.c.l.s4 1983009808
        %v497 = vunpack.c.0.s8 %v496
        %v498 = vlaneseq
        %v499 = vshrl.u32 %v498, 7
        %v500 = vsub.s32 %v497, %v499
        %v501 = vrot.slane %v494, %v500
        %v502 = vcombine.low %v477, %v485
        %v503 = vcombine.high %v477, %v485
        %v505 = vunpack.c.l.s4 1934713408
        %v506 = vunpack.c.0.s8 %v505
        %v507 = vlaneseq
        %v508 = vshrl.u32 %v507, 7
        %v509 = vsub.s32 %v506, %v508
        %v510 = vrot.slane %v502, %v509
        %v512 = vunpack.c.l.s4 1934713408
        %v513 = vunpack.c.0.s8 %v512
        %v514 = vlaneseq
        %v515 = vshrl.u32 %v514, 7
        %v516 = vsub.s32 %v513, %v515
        %v517 = vrot.slane %v503, %v516
        %v518 = vcombine.low %v493, %v501
        %v519 = vcombine.high %v493, %v501
        %v521 = vunpack.c.l.s4 1934713408
        %v522 = vunpack.c.0.s8 %v521
        %v523 = vlaneseq
        %v524 = vshrl.u32 %v523, 7
        %v525 = vsub.s32 %v522, %v524
        %v526 = vrot.slane %v518, %v525
        %v528 = vunpack.c.l.s4 1934713408
        %v529 = vunpack.c.0.s8 %v528
        %v530 = vlaneseq
        %v531 = vshrl.u32 %v530, 7
        %v532 = vsub.s32 %v529, %v531
        %v533 = vrot.slane %v519, %v532
        %v534 = vcombine.low %v510, %v526
        %v535 = vcombine.high %v510, %v526
        %v536 = vcombine.low %v517, %v533
        %v537 = vcombine.high %v517, %v533
        %v538 = vpack.c.bf16 %v534, %v534
        %v539 = vpack.c.bf16 %v535, %v535
        %v540 = vpack.c.bf16 %v536, %v536
        %v541 = vpack.c.bf16 %v537, %v537
        %vm542 = vcmask 60416
        %543 = vst.msk [vmem:[%s233] sm:$0xf] %vm542, %v538
        %544 = vst.msk [vmem:[%s233 + $0x4] sm:$0xf] %vm542, %v539
        %545 = vst.msk [vmem:[%s233 + $0x8] sm:$0xf] %vm542, %v540
        %546 = vst.msk [vmem:[%s233 + $0xc] sm:$0xf] %vm542, %v541
        %s547 = sand.u32 %s134, 1
        %s548 = scalar_lea.sflag [#allocation4], %s547
        %s549 = sand.u32 %s134, 1
        %s550 = smul.addr %s549, 16
        %s551 = scalar_lea.vmem [#allocation5], %s550
        // Predicated region
        $region41: #{tpu_custom_call.1} parent=35 // pred_check
          %p552 = pneg %p144
        $region42: #{tpu_custom_call.1} parent=35 // pred_check_branch
          %554 = sbr.rel (%p552) target = $region44
        $region43: #{tpu_custom_call.1} parent=35 // pred_region
          %s556 = ssub.s32 256, 256
          %557 = vsyncadd %s548, %s556
          %s558 = smul.addr %s25, 4
          %s559 = sadd.s32 %s26, %s558
          %s560 = smul.addr %s559, 64
          %s561 = scalar_lea.hbm %s4, %s560
          %s562 = sshll.u32 %s551, 4
          %s563 = int_to_ptr.vmem [resolvable:$true] %s562
          %568 = dma.vmem_to_hbm [thread:$0]  %s563, 256, %s561, %s548, 64, 64, 4
        $region44: #{tpu_custom_call.1} parent=35 // pred_fallthru
          _
      $region36: #{tpu_custom_call.1} parent=5 // pred_fallthru
        _
      %p569 = scmp.le.s32.totalorder 2, %s16
      // Predicated region
      $region45: #{tpu_custom_call.1} parent=5 // pred_check
        %p570 = pneg %p569
      $region46: #{tpu_custom_call.1} parent=5 // pred_check_branch
        %572 = sbr.rel (%p570) target = $region48
      $region47: #{tpu_custom_call.1} parent=5 // pred_region
        %s573 = ssub.s32 %s16, 2
        // Predicated region
        $region49: #{tpu_custom_call.1} parent=47 // pred_check
          %p574 = pneg %p150
        $region50: #{tpu_custom_call.1} parent=47 // pred_check_branch
          %576 = sbr.rel (%p574) target = $region52
        $region51: #{tpu_custom_call.1} parent=47 // pred_region
          %s577 = sand.u32 %s135, 1
          %s578 = scalar_lea.sflag [#allocation4], %s577
          %s579 = sand.u32 %s135, 1
          %s580 = smul.addr %s579, 16
          %s581 = scalar_lea.vmem [#allocation5], %s580
          %582 = dma.done %s578, 256
        $region52: #{tpu_custom_call.1} parent=47 // pred_fallthru
          _
      $region48: #{tpu_custom_call.1} parent=5 // pred_fallthru
        _
    $region6: #{tpu_custom_call.1} parent=1 // loop_footer
      %s20 = sadd.s32 1, %s16
    $region7: #{tpu_custom_call.1} parent=1 // loop_footer_branch
      %15 = sbr.rel target = $region3
    $region8: #{tpu_custom_call.1} parent=1 // loop_exit
      _
    %583 = vsyncpa [#allocation3], 1
    %s584 = scalar_lea.sflag [#allocation3], 1
    %585 = vsyncpa %s584, 1
    %586 = vsyncpa [#allocation4], 1
    %s587 = scalar_lea.sflag [#allocation4], 1
    %588 = vsyncpa %s587, 1

</llo_original>
